<compile_context>
chip_gen: v7x
topology: tpu7x:2x2x1
jax: 0.10.0
libtpu: 0.0.40
codegen_flags: <defaults>
</compile_context>

<pallas_src>
import jax
import jax.numpy as jnp
from jax.experimental import pallas as pl
from jax.experimental.pallas import tpu as pltpu


def bmm_kernel(x1_ref, x2_ref, o_ref):
    # Full arrays are resident in VMEM:
    #   x1_ref: (B, M, K), x2_ref: (B, K, N), o_ref: (B, M, N)
    B = x1_ref.shape[0]
    # Statically unrolled batch loop -> back-to-back MXU pushes, pipeline warm.
    for b in range(B):
        a = x1_ref[b]          # (M, K)
        w = x2_ref[b]          # (K, N)
        o_ref[b] = jnp.dot(
            a, w, preferred_element_type=jnp.float32
        ).astype(o_ref.dtype)


def model_forward(x1, x2):
    """x1: (B, M, K) f32, x2: (B, K, N) f32. Returns bmm(x1, x2) = (B, M, N)."""
    B, M, K = x1.shape
    B2, K2, N = x2.shape
    assert B2 == B and K2 == K

    return pl.pallas_call(
        bmm_kernel,
        out_shape=jax.ShapeDtypeStruct((B, M, N), jnp.float32),
        grid=(1,),
        in_specs=[
            pl.BlockSpec((B, M, K), lambda i: (0, 0, 0)),
            pl.BlockSpec((B, K, N), lambda i: (0, 0, 0)),
        ],
        out_specs=pl.BlockSpec((B, M, N), lambda i: (0, 0, 0)),
        compiler_params=pltpu.CompilerParams(
            dimension_semantics=("arbitrary",),
        ),
    )(x1, x2)


if __name__ == "__main__":
    # Small, TPU-tile-friendly shapes consistent with the (1, 2, 2) reference:
    # K == N so both matmul variants in the original module are well-defined.
    B, M, K, N = 2, 8, 128, 128

    key = jax.random.PRNGKey(0)
    k1, k2 = jax.random.split(key)
    x1 = jax.random.normal(k1, (B, M, K), dtype=jnp.float32)
    x2 = jax.random.normal(k2, (B, K, N), dtype=jnp.float32)

    out = model_forward(x1, x2)
    out = jax.block_until_ready(out)

    # Sanity check against plain JAX bmm.
    ref = jnp.einsum("bmk,bkn->bmn", x1, x2)
    assert out.shape == (B, M, N)
    assert jnp.allclose(out, ref, atol=1e-4, rtol=1e-4)

    print("KERNEL_OK")
</pallas_src>

<mosaic_0001>
module attributes {stable_mosaic.version = 11 : i64} {
  func.func @bmm_kernel(%arg0: i32, %arg1: memref<2x8x128xf32, #tpu.memory_space<vmem>>, %arg2: memref<2x128x128xf32, #tpu.memory_space<vmem>>, %arg3: memref<2x8x128xf32, #tpu.memory_space<vmem>>) attributes {dimension_semantics = [#tpu.dimension_semantics<arbitrary>], iteration_bounds = array<i64: 1>, scalar_prefetch = 0 : i64, scratch_operands = 0 : i64, tpu.core_type = #tpu.core_type<tc>, window_params = [{pipeline_mode = #tpu.pipeline_mode<synchronous>, transform_indices = @transform_0, window_bounds = array<i64: 2, 8, 128>}, {pipeline_mode = #tpu.pipeline_mode<synchronous>, transform_indices = @transform_1, window_bounds = array<i64: 2, 128, 128>}, {pipeline_mode = #tpu.pipeline_mode<synchronous>, transform_indices = @transform_2, window_bounds = array<i64: 2, 8, 128>}]} {
    %c0 = arith.constant 0 : index
    %c0_0 = arith.constant 0 : index
    %c0_1 = arith.constant 0 : index
    %0 = vector.load %arg1[%c0, %c0_0, %c0_1] : memref<2x8x128xf32, #tpu.memory_space<vmem>>, vector<1x8x128xf32>
    %1 = vector.shape_cast %0 : vector<1x8x128xf32> to vector<8x128xf32>
    %c0_2 = arith.constant 0 : index
    %c0_3 = arith.constant 0 : index
    %c0_4 = arith.constant 0 : index
    %2 = vector.load %arg2[%c0_2, %c0_3, %c0_4] : memref<2x128x128xf32, #tpu.memory_space<vmem>>, vector<1x128x128xf32>
    %3 = vector.shape_cast %2 : vector<1x128x128xf32> to vector<128x128xf32>
    %cst = arith.constant dense<0.000000e+00> : vector<8x128xf32>
    %4 = tpu.matmul %1, %3, %cst {dimension_numbers = #tpu.dot_dimension_numbers<[1], [0], [0], [1], [0, 0, 1, 1], [], []>} : vector<8x128xf32>, vector<128x128xf32>, vector<8x128xf32> -> vector<8x128xf32>
    %c0_5 = arith.constant 0 : index
    %c0_6 = arith.constant 0 : index
    %c0_7 = arith.constant 0 : index
    %5 = vector.load %arg3[%c0_5, %c0_6, %c0_7] : memref<2x8x128xf32, #tpu.memory_space<vmem>>, vector<1x8x128xf32>
    %6 = vector.shape_cast %5 : vector<1x8x128xf32> to vector<8x128xf32>
    %7 = vector.shape_cast %4 : vector<8x128xf32> to vector<1x8x128xf32>
    tpu.vector_store %arg3[%c0_5, %c0_6, %c0_7], %7 {strides = array<i32>} : memref<2x8x128xf32, #tpu.memory_space<vmem>>, vector<1x8x128xf32>,
    %c1 = arith.constant 1 : index
    %c0_8 = arith.constant 0 : index
    %c0_9 = arith.constant 0 : index
    %8 = vector.load %arg1[%c1, %c0_8, %c0_9] : memref<2x8x128xf32, #tpu.memory_space<vmem>>, vector<1x8x128xf32>
    %9 = vector.shape_cast %8 : vector<1x8x128xf32> to vector<8x128xf32>
    %c1_10 = arith.constant 1 : index
    %c0_11 = arith.constant 0 : index
    %c0_12 = arith.constant 0 : index
    %10 = vector.load %arg2[%c1_10, %c0_11, %c0_12] : memref<2x128x128xf32, #tpu.memory_space<vmem>>, vector<1x128x128xf32>
    %11 = vector.shape_cast %10 : vector<1x128x128xf32> to vector<128x128xf32>
    %cst_13 = arith.constant dense<0.000000e+00> : vector<8x128xf32>
    %12 = tpu.matmul %9, %11, %cst_13 {dimension_numbers = #tpu.dot_dimension_numbers<[1], [0], [0], [1], [0, 0, 1, 1], [], []>} : vector<8x128xf32>, vector<128x128xf32>, vector<8x128xf32> -> vector<8x128xf32>
    %c1_14 = arith.constant 1 : index
    %c0_15 = arith.constant 0 : index
    %c0_16 = arith.constant 0 : index
    %13 = vector.load %arg3[%c1_14, %c0_15, %c0_16] : memref<2x8x128xf32, #tpu.memory_space<vmem>>, vector<1x8x128xf32>
    %14 = vector.shape_cast %13 : vector<1x8x128xf32> to vector<8x128xf32>
    %15 = vector.shape_cast %12 : vector<8x128xf32> to vector<1x8x128xf32>
    tpu.vector_store %arg3[%c1_14, %c0_15, %c0_16], %15 {strides = array<i32>} : memref<2x8x128xf32, #tpu.memory_space<vmem>>, vector<1x8x128xf32>,
    return
  }
  func.func @transform_0(%arg0: i32) -> (i32, i32, i32) {
    %c0_i32 = arith.constant 0 : i32
    %c0_i32_0 = arith.constant 0 : i32
    %c0_i32_1 = arith.constant 0 : i32
    %c0_i32_2 = arith.constant 0 : i32
    return %c0_i32, %c0_i32_0, %c0_i32_1 : i32, i32, i32
  }
  func.func @transform_1(%arg0: i32) -> (i32, i32, i32) {
    %c0_i32 = arith.constant 0 : i32
    %c0_i32_0 = arith.constant 0 : i32
    %c0_i32_1 = arith.constant 0 : i32
    %c0_i32_2 = arith.constant 0 : i32
    return %c0_i32, %c0_i32_0, %c0_i32_1 : i32, i32, i32
  }
  func.func @transform_2(%arg0: i32) -> (i32, i32, i32) {
    %c0_i32 = arith.constant 0 : i32
    %c0_i32_0 = arith.constant 0 : i32
    %c0_i32_1 = arith.constant 0 : i32
    %c0_i32_2 = arith.constant 0 : i32
    return %c0_i32, %c0_i32_0, %c0_i32_1 : i32, i32, i32
  }
}

</mosaic_0001>

<llo_original>
// kernel: tpu_custom_call.1
$region0: #{tpu_custom_call.1}
  #allocation0 [shape = 'u32[]', space=smem, size = 0x4, offset = 0x4, fixed_abs, tag = 'smem constant byte address 0x4 - core index']
  #allocation1 [shape = 'u32[144,128]{1,0:T(1,128)}', space=vmem, size = 0x12000, scoped, tag = 'internal scratch']
  %s0 = inlined_call_operand.hbm [shape: f32[2,8,128], index: 0, kind: input, shape index: {}]
  %s1 = inlined_call_operand.hbm [shape: f32[2,128,128], index: 1, kind: input, shape index: {}]
  %s2 = inlined_call_operand.hbm [shape: f32[2,8,128], index: 2, kind: output, shape index: {}]
  %s3 = sld [smem:[#allocation0]]
  $region26: #{tpu_custom_call.1} parent=0
    _
  %s5 = ssub.s32 1, %s3
  %s6 = scalar_select 0, %s5, %s3
  $region1: #{tpu_custom_call.1} parent=0
    #allocation2 [shape = 'u8[8192]{0}', space=vmem, size = 0x2000, scoped, tag = 'input window, operand 0, single buffered']
    #allocation3 [shape = 's32[1]{0}', space=sflag, size = 0x4, scoped, tag = 'scoped memory for tpu_custom_call.1']
    #allocation4 [shape = 's32[1]{0}', space=sflag, size = 0x4, scoped, tag = 'scoped memory for tpu_custom_call.1']
    #allocation5 [shape = 'u8[131072]{0}', space=vmem, size = 0x20000, scoped, tag = 'input window, operand 1, single buffered']
    #allocation6 [shape = 's32[1]{0}', space=sflag, size = 0x4, scoped, tag = 'scoped memory for tpu_custom_call.1']
    #allocation7 [shape = 'u8[8192]{0}', space=vmem, size = 0x2000, scoped, tag = 'output window, operand 0, single buffered']
    %7 = vsyncpa [#allocation3], 0
    %8 = vsyncpa [#allocation6], 0
    %9 = vsyncpa [#allocation4], 0
    // Predicated region
    $region2: #{tpu_custom_call.1} parent=1 // pred_check
      _
    $region3: #{tpu_custom_call.1} parent=1 // pred_check_branch
      %11 = sbr.rel (0) target = $region5
    $region4: #{tpu_custom_call.1} parent=1 // pred_region
      %s13 = ssub.s32 256, 256
      %14 = vsyncadd [#allocation3], %s13
      %s15 = sshll.u32 [#allocation2], 4
      %s16 = int_to_ptr.vmem [resolvable:$true] %s15
      %21 = dma.hbm_to_vmem [thread:$0]  %s0, 256, %s16, [#allocation3], 128, 128, 8
    $region5: #{tpu_custom_call.1} parent=1 // pred_fallthru
      _
    // Predicated region
    $region6: #{tpu_custom_call.1} parent=1 // pred_check
      _
    $region7: #{tpu_custom_call.1} parent=1 // pred_check_branch
      %23 = sbr.rel (0) target = $region9
    $region8: #{tpu_custom_call.1} parent=1 // pred_region
      %s25 = ssub.s32 4096, 4096
      %26 = vsyncadd [#allocation6], %s25
      %s27 = sshll.u32 [#allocation5], 4
      %s28 = int_to_ptr.vmem [resolvable:$true] %s27
      %33 = dma.hbm_to_vmem [thread:$0]  %s1, 4096, %s28, [#allocation6], 128, 128, 8
    $region9: #{tpu_custom_call.1} parent=1 // pred_fallthru
      _
    // Predicated region
    $region10: #{tpu_custom_call.1} parent=1 // pred_check
      _
    $region11: #{tpu_custom_call.1} parent=1 // pred_check_branch
      %35 = sbr.rel (0) target = $region13
    $region12: #{tpu_custom_call.1} parent=1 // pred_region
      %36 = dma.done [#allocation3], 256
    $region13: #{tpu_custom_call.1} parent=1 // pred_fallthru
      _
    // Predicated region
    $region14: #{tpu_custom_call.1} parent=1 // pred_check
      _
    $region15: #{tpu_custom_call.1} parent=1 // pred_check_branch
      %38 = sbr.rel (0) target = $region17
    $region16: #{tpu_custom_call.1} parent=1 // pred_region
      %39 = dma.done [#allocation6], 4096
    $region17: #{tpu_custom_call.1} parent=1 // pred_fallthru
      _
    %v40 = vld [vmem:[#allocation2] sm:$0xff]
    %v41 = vld [vmem:[#allocation5] sm:$0xff]
    %v42 = vld [vmem:[#allocation5 + $0x8] sm:$0xff]
    %v43 = vld [vmem:[#allocation5 + $0x10] sm:$0xff]
    %v44 = vld [vmem:[#allocation5 + $0x18] sm:$0xff]
    %v45 = vld [vmem:[#allocation5 + $0x20] sm:$0xff]
    %v46 = vld [vmem:[#allocation5 + $0x28] sm:$0xff]
    %v47 = vld [vmem:[#allocation5 + $0x30] sm:$0xff]
    %v48 = vld [vmem:[#allocation5 + $0x38] sm:$0xff]
    %v49 = vld [vmem:[#allocation5 + $0x40] sm:$0xff]
    %v50 = vld [vmem:[#allocation5 + $0x48] sm:$0xff]
    %v51 = vld [vmem:[#allocation5 + $0x50] sm:$0xff]
    %v52 = vld [vmem:[#allocation5 + $0x58] sm:$0xff]
    %v53 = vld [vmem:[#allocation5 + $0x60] sm:$0xff]
    %v54 = vld [vmem:[#allocation5 + $0x68] sm:$0xff]
    %v55 = vld [vmem:[#allocation5 + $0x70] sm:$0xff]
    %v56 = vld [vmem:[#allocation5 + $0x78] sm:$0xff]
    %57 = vmatprep.subr.mxu0 0.0
    %58 = vmatpush1.msra.mxu0 %v41
    %59 = vmatprep.subr.mxu0 0.0
    %60 = vmatpush1.msra.mxu0 %v42
    %61 = vmatprep.subr.mxu0 0.0
    %62 = vmatpush1.msra.mxu0 %v43
    %63 = vmatprep.subr.mxu0 0.0
    %64 = vmatpush1.msra.mxu0 %v44
    %65 = vmatprep.subr.mxu0 0.0
    %66 = vmatpush1.msra.mxu0 %v45
    %67 = vmatprep.subr.mxu0 0.0
    %68 = vmatpush1.msra.mxu0 %v46
    %69 = vmatprep.subr.mxu0 0.0
    %70 = vmatpush1.msra.mxu0 %v47
    %71 = vmatprep.subr.mxu0 0.0
    %72 = vmatpush1.msra.mxu0 %v48
    %73 = vmatprep.subr.mxu0 0.0
    %74 = vmatpush1.msra.mxu0 %v49
    %75 = vmatprep.subr.mxu0 0.0
    %76 = vmatpush1.msra.mxu0 %v50
    %77 = vmatprep.subr.mxu0 0.0
    %78 = vmatpush1.msra.mxu0 %v51
    %79 = vmatprep.subr.mxu0 0.0
    %80 = vmatpush1.msra.mxu0 %v52
    %81 = vmatprep.subr.mxu0 0.0
    %82 = vmatpush1.msra.mxu0 %v53
    %83 = vmatprep.subr.mxu0 0.0
    %84 = vmatpush1.msra.mxu0 %v54
    %85 = vmatprep.subr.mxu0 0.0
    %86 = vmatpush1.msra.mxu0 %v55
    %87 = vmatprep.subr.mxu0 0.0
    %88 = vmatpush1.msra.mxu0 %v56
    %89 = vmatprep.subr.mxu0 0.0
    %90 = vmatpush1.msra.mxu0 0.0
    %91 = vmatprep.subr.mxu0 0.0
    %92 = vmatpush1.msra.mxu0 0.0
    %93 = vmatprep.subr.mxu0 0.0
    %94 = vmatpush1.msra.mxu0 0.0
    %95 = vmatprep.subr.mxu0 0.0
    %96 = vmatpush1.msra.mxu0 0.0
    %97 = vmatprep.subr.mxu0 0.0
    %98 = vmatpush1.msra.mxu0 0.0
    %99 = vmatprep.subr.mxu0 0.0
    %100 = vmatpush1.msra.mxu0 0.0
    %101 = vmatprep.subr.mxu0 0.0
    %102 = vmatpush1.msra.mxu0 0.0
    %103 = vmatprep.subr.mxu0 0.0
    %104 = vmatpush1.msra.mxu0 0.0
    %105 = vmatprep.subr.mxu0 0.0
    %106 = vmatpush1.msra.mxu0 0.0
    %107 = vmatprep.subr.mxu0 0.0
    %108 = vmatpush1.msra.mxu0 0.0
    %109 = vmatprep.subr.mxu0 0.0
    %110 = vmatpush1.msra.mxu0 0.0
    %111 = vmatprep.subr.mxu0 0.0
    %112 = vmatpush1.msra.mxu0 0.0
    %113 = vmatprep.subr.mxu0 0.0
    %114 = vmatpush1.msra.mxu0 0.0
    %115 = vmatprep.subr.mxu0 0.0
    %116 = vmatpush1.msra.mxu0 0.0
    %117 = vmatprep.subr.mxu0 0.0
    %118 = vmatpush1.msra.mxu0 0.0
    %119 = vmatprep.subr.mxu0 0.0
    %120 = vmatpush1.msra.mxu0 0.0
    %121 = vmatprep.mubr.f32.mxu0 0.0
    %122 = vmatmul.mubr.f32.gmra.mrb[0].mxu0 %v40
    %v123 = vpop.f32.mrb[0].mxu0
    %v124 = vadd.f32 0.0, %v123
    %v125 = vpop.f32.mrb[0].mxu0
    %126 = vdwg.mxu0
    %127 = vst [vmem:[#allocation7] sm:$0xff] %v124
    %s128 = scalar_lea.vmem [#allocation2], 8
    %v129 = vld [vmem:[%s128] sm:$0xff]
    %s130 = scalar_lea.vmem [#allocation5], 128
    %v131 = vld [vmem:[%s130] sm:$0xff]
    %v132 = vld [vmem:[%s130 + $0x8] sm:$0xff]
    %v133 = vld [vmem:[%s130 + $0x10] sm:$0xff]
    %v134 = vld [vmem:[%s130 + $0x18] sm:$0xff]
    %v135 = vld [vmem:[%s130 + $0x20] sm:$0xff]
    %v136 = vld [vmem:[%s130 + $0x28] sm:$0xff]
    %v137 = vld [vmem:[%s130 + $0x30] sm:$0xff]
    %v138 = vld [vmem:[%s130 + $0x38] sm:$0xff]
    %v139 = vld [vmem:[%s130 + $0x40] sm:$0xff]
    %v140 = vld [vmem:[%s130 + $0x48] sm:$0xff]
    %v141 = vld [vmem:[%s130 + $0x50] sm:$0xff]
    %v142 = vld [vmem:[%s130 + $0x58] sm:$0xff]
    %v143 = vld [vmem:[%s130 + $0x60] sm:$0xff]
    %v144 = vld [vmem:[%s130 + $0x68] sm:$0xff]
    %v145 = vld [vmem:[%s130 + $0x70] sm:$0xff]
    %v146 = vld [vmem:[%s130 + $0x78] sm:$0xff]
    %147 = vmatprep.subr.mxu0 0.0
    %148 = vmatpush1.msra.mxu0 %v131
    %149 = vmatprep.subr.mxu0 0.0
    %150 = vmatpush1.msra.mxu0 %v132
    %151 = vmatprep.subr.mxu0 0.0
    %152 = vmatpush1.msra.mxu0 %v133
    %153 = vmatprep.subr.mxu0 0.0
    %154 = vmatpush1.msra.mxu0 %v134
    %155 = vmatprep.subr.mxu0 0.0
    %156 = vmatpush1.msra.mxu0 %v135
    %157 = vmatprep.subr.mxu0 0.0
    %158 = vmatpush1.msra.mxu0 %v136
    %159 = vmatprep.subr.mxu0 0.0
    %160 = vmatpush1.msra.mxu0 %v137
    %161 = vmatprep.subr.mxu0 0.0
    %162 = vmatpush1.msra.mxu0 %v138
    %163 = vmatprep.subr.mxu0 0.0
    %164 = vmatpush1.msra.mxu0 %v139
    %165 = vmatprep.subr.mxu0 0.0
    %166 = vmatpush1.msra.mxu0 %v140
    %167 = vmatprep.subr.mxu0 0.0
    %168 = vmatpush1.msra.mxu0 %v141
    %169 = vmatprep.subr.mxu0 0.0
    %170 = vmatpush1.msra.mxu0 %v142
    %171 = vmatprep.subr.mxu0 0.0
    %172 = vmatpush1.msra.mxu0 %v143
    %173 = vmatprep.subr.mxu0 0.0
    %174 = vmatpush1.msra.mxu0 %v144
    %175 = vmatprep.subr.mxu0 0.0
    %176 = vmatpush1.msra.mxu0 %v145
    %177 = vmatprep.subr.mxu0 0.0
    %178 = vmatpush1.msra.mxu0 %v146
    %179 = vmatprep.subr.mxu0 0.0
    %180 = vmatpush1.msra.mxu0 0.0
    %181 = vmatprep.subr.mxu0 0.0
    %182 = vmatpush1.msra.mxu0 0.0
    %183 = vmatprep.subr.mxu0 0.0
    %184 = vmatpush1.msra.mxu0 0.0
    %185 = vmatprep.subr.mxu0 0.0
    %186 = vmatpush1.msra.mxu0 0.0
    %187 = vmatprep.subr.mxu0 0.0
    %188 = vmatpush1.msra.mxu0 0.0
    %189 = vmatprep.subr.mxu0 0.0
    %190 = vmatpush1.msra.mxu0 0.0
    %191 = vmatprep.subr.mxu0 0.0
    %192 = vmatpush1.msra.mxu0 0.0
    %193 = vmatprep.subr.mxu0 0.0
    %194 = vmatpush1.msra.mxu0 0.0
    %195 = vmatprep.subr.mxu0 0.0
    %196 = vmatpush1.msra.mxu0 0.0
    %197 = vmatprep.subr.mxu0 0.0
    %198 = vmatpush1.msra.mxu0 0.0
    %199 = vmatprep.subr.mxu0 0.0
    %200 = vmatpush1.msra.mxu0 0.0
    %201 = vmatprep.subr.mxu0 0.0
    %202 = vmatpush1.msra.mxu0 0.0
    %203 = vmatprep.subr.mxu0 0.0
    %204 = vmatpush1.msra.mxu0 0.0
    %205 = vmatprep.subr.mxu0 0.0
    %206 = vmatpush1.msra.mxu0 0.0
    %207 = vmatprep.subr.mxu0 0.0
    %208 = vmatpush1.msra.mxu0 0.0
    %209 = vmatprep.subr.mxu0 0.0
    %210 = vmatpush1.msra.mxu0 0.0
    %211 = vmatprep.mubr.f32.mxu0 0.0
    %212 = vmatmul.mubr.f32.gmra.mrb[0].mxu0 %v129
    %v213 = vpop.f32.mrb[0].mxu0
    %v214 = vadd.f32 0.0, %v213
    %v215 = vpop.f32.mrb[0].mxu0
    %216 = vdwg.mxu0
    %s217 = scalar_lea.vmem [#allocation7], 8
    %218 = vst [vmem:[%s217] sm:$0xff] %v214
    // Predicated region
    $region18: #{tpu_custom_call.1} parent=1 // pred_check
      _
    $region19: #{tpu_custom_call.1} parent=1 // pred_check_branch
      %220 = sbr.rel (0) target = $region21
    $region20: #{tpu_custom_call.1} parent=1 // pred_region
      %s222 = ssub.s32 256, 256
      %223 = vsyncadd [#allocation4], %s222
      %s224 = sshll.u32 [#allocation7], 4
      %s225 = int_to_ptr.vmem [resolvable:$true] %s224
      %230 = dma.vmem_to_hbm [thread:$0]  %s225, 256, %s2, [#allocation4], 128, 128, 8
    $region21: #{tpu_custom_call.1} parent=1 // pred_fallthru
      _
    // Predicated region
    $region22: #{tpu_custom_call.1} parent=1 // pred_check
      _
    $region23: #{tpu_custom_call.1} parent=1 // pred_check_branch
      %232 = sbr.rel (0) target = $region25
    $region24: #{tpu_custom_call.1} parent=1 // pred_region
      %233 = dma.done [#allocation4], 256
    $region25: #{tpu_custom_call.1} parent=1 // pred_fallthru
      _
    %234 = vsyncpa [#allocation3], 1
    %235 = vsyncpa [#allocation6], 1
    %236 = vsyncpa [#allocation4], 1

</llo_original>
